<compile_context>
chip_gen: v5e
topology: v5e:2x2
jax: 0.10.0
libtpu: 0.0.40
codegen_flags: <defaults>
</compile_context>

<pallas_src>
import jax
import jax.numpy as jnp
from jax.experimental import pallas as pl
from jax.experimental.pallas import tpu as pltpu


_VMEM_LIMIT = 48 * 1024 * 1024  # raise scoped VMEM above the 16/32 MiB defaults


# ---------------------------------------------------------------------------
# Generic tiled matmul-with-bias kernel:  out = x @ w + b
# Used for (a) the input-side LSTM gate precompute and (b) the vocab projection.
# Grid = (M/tm, N/tn, K/tk); K is the reduction axis with a VMEM accumulator.
# ---------------------------------------------------------------------------
def _matmul_bias_kernel(x_ref, w_ref, b_ref, o_ref, acc_ref):
    @pl.when(pl.program_id(2) == 0)
    def _():
        acc_ref[...] = jnp.zeros_like(acc_ref)

    acc_ref[...] += jnp.dot(x_ref[...], w_ref[...],
                            preferred_element_type=jnp.float32)

    @pl.when(pl.program_id(2) == pl.num_programs(2) - 1)
    def _():
        o_ref[...] = (acc_ref[...] + b_ref[...]).astype(o_ref.dtype)


def _pick_tile(dim, preferred):
    for t in preferred:
        if dim % t == 0:
            return t
    return dim  # fall back to the full (untiled) dimension


def matmul_bias(x, w, b, out_dtype=jnp.float32):
    """out = x @ w + b, as a parallel tiled Pallas matmul."""
    M, K = x.shape
    K2, N = w.shape
    assert K == K2
    tm = _pick_tile(M, (256, 128))
    tn = _pick_tile(N, (256, 128))
    tk = _pick_tile(K, (512, 256, 128))
    grid = (M // tm, N // tn, K // tk)
    return pl.pallas_call(
        _matmul_bias_kernel,
        out_shape=jax.ShapeDtypeStruct((M, N), out_dtype),
        grid_spec=pltpu.PrefetchScalarGridSpec(
            num_scalar_prefetch=0,
            grid=grid,
            in_specs=[
                pl.BlockSpec((tm, tk), lambda i, j, k: (i, k)),   # x
                pl.BlockSpec((tk, tn), lambda i, j, k: (k, j)),   # w
                pl.BlockSpec((1, tn), lambda i, j, k: (0, j)),    # bias row
            ],
            out_specs=pl.BlockSpec((tm, tn), lambda i, j, k: (i, j)),
            scratch_shapes=[pltpu.VMEM((tm, tn), jnp.float32)],
        ),
        compiler_params=pltpu.CompilerParams(
            dimension_semantics=("parallel", "parallel", "arbitrary"),
            vmem_limit_bytes=_VMEM_LIMIT),
    )(x, w, b.reshape(1, N))


# ---------------------------------------------------------------------------
# Time-blocked LSTM recurrence kernel.
#   gx_ref:    (T_BLK, batch, 4H) precomputed x @ W_ih^T + bias for this block
#   whh_t_ref: (H, 4H)            recurrent weight (constant, single-buffered)
#   h0/c0:     (batch, H)         initial state (constant, single-buffered)
#   h_all_ref: (T_BLK, batch, H)  per-step hidden states (for the projection)
#   h_n/c_n:   (batch, H)         final state (written on the last grid step)
# h/c are carried across grid iterations in f32 VMEM scratch.
# ---------------------------------------------------------------------------
def _lstm_recurrence_kernel(gx_ref, whh_t_ref, h0_ref, c0_ref,
                            h_all_ref, h_n_ref, c_n_ref,
                            h_sc, c_sc):
    blk = pl.program_id(0)

    @pl.when(blk == 0)
    def _():
        h_sc[...] = h0_ref[...].astype(jnp.float32)
        c_sc[...] = c0_ref[...].astype(jnp.float32)

    hidden = h_sc.shape[-1]
    t_blk = gx_ref.shape[0]

    def step(t, carry):
        h = h_sc[...]
        c = c_sc[...]
        # Only the recurrent matmul remains on the serial critical path.
        gates = gx_ref[t].astype(jnp.float32) + jnp.dot(
            h, whh_t_ref[...], preferred_element_type=jnp.float32)
        # PyTorch gate order: i, f, g, o.  (At real sizes make hidden a
        # multiple of 128 so these column slices are lane-aligned.)
        i_g = jax.nn.sigmoid(gates[:, 0 * hidden:1 * hidden])
        f_g = jax.nn.sigmoid(gates[:, 1 * hidden:2 * hidden])
        g_g = jnp.tanh(gates[:, 2 * hidden:3 * hidden])
        o_g = jax.nn.sigmoid(gates[:, 3 * hidden:4 * hidden])
        c_new = f_g * c + i_g * g_g
        h_new = o_g * jnp.tanh(c_new)
        h_sc[...] = h_new
        c_sc[...] = c_new
        h_all_ref[t] = h_new.astype(h_all_ref.dtype)
        return carry

    jax.lax.fori_loop(0, t_blk, step, 0, unroll=True)

    @pl.when(blk == pl.num_programs(0) - 1)
    def _():
        h_n_ref[...] = h_sc[...].astype(h_n_ref.dtype)
        c_n_ref[...] = c_sc[...].astype(c_n_ref.dtype)


def _largest_divisor(n, cap):
    t = min(n, cap)
    while n % t:
        t -= 1
    return t


def _lstm_recurrence(gates_x, whh_t, h0, c0, *, time_block, single_buffer):
    seq_len, batch, g4 = gates_x.shape
    hidden_size = whh_t.shape[0]
    t_blk = _largest_divisor(seq_len, time_block)
    n_blocks = seq_len // t_blk

    def const_spec(shape):
        # Blocks with a constant index_map: never re-fetched, so no need for
        # double buffering.
        idx = lambda b: tuple(0 for _ in shape)
        if single_buffer:
            return pl.BlockSpec(shape, idx, pipeline_mode=pl.Buffered(1))
        return pl.BlockSpec(shape, idx)

    grid_spec = pltpu.PrefetchScalarGridSpec(
        num_scalar_prefetch=0,
        grid=(n_blocks,),
        in_specs=[
            pl.BlockSpec((t_blk, batch, g4), lambda b: (b, 0, 0)),  # gates_x slab
            const_spec((hidden_size, g4)),                          # W_hh^T
            const_spec((batch, hidden_size)),                       # h0
            const_spec((batch, hidden_size)),                       # c0
        ],
        out_specs=[
            pl.BlockSpec((t_blk, batch, hidden_size), lambda b: (b, 0, 0)),  # h_all
            pl.BlockSpec((batch, hidden_size), lambda b: (0, 0)),            # h_n
            pl.BlockSpec((batch, hidden_size), lambda b: (0, 0)),            # c_n
        ],
        scratch_shapes=[
            pltpu.VMEM((batch, hidden_size), jnp.float32),  # h carry
            pltpu.VMEM((batch, hidden_size), jnp.float32),  # c carry
        ],
    )
    return pl.pallas_call(
        _lstm_recurrence_kernel,
        grid_spec=grid_spec,
        out_shape=(
            jax.ShapeDtypeStruct((seq_len, batch, hidden_size), jnp.float32),
            jax.ShapeDtypeStruct((batch, hidden_size), jnp.float32),
            jax.ShapeDtypeStruct((batch, hidden_size), jnp.float32),
        ),
        compiler_params=pltpu.CompilerParams(
            dimension_semantics=("arbitrary",),   # recurrence is sequential in time
            vmem_limit_bytes=_VMEM_LIMIT),
    )(gates_x, whh_t, h0, c0)


def language_model_forward(text, hidden, params, *, time_block=8):
    """Mirrors LanguageModelNN.forward.

    text:   (seq_len, batch) int32 token ids
    hidden: tuple (h0, c0), each (1, batch, hidden_size) float32
    returns (logits of shape (seq_len*batch, vocab), (h_n, c_n))
    """
    emb, w_ih, w_hh, b_ih, b_hh, w_lin, b_lin = (
        params["embedding"], params["w_ih"], params["w_hh"],
        params["b_ih"], params["b_hh"], params["w_lin"], params["b_lin"])

    seq_len, batch = text.shape
    embed = emb.shape[1]
    hidden_size = w_hh.shape[1]
    vocab = w_lin.shape[0]

    # TODO(synk): embedding gather stays in XLA glue (data-dependent row gather;
    # a scalar-prefetch + pl.Element Pallas gather is possible but not worth it).
    x_emb = emb[text]                                   # (seq, batch, embed)

    h0 = hidden[0][0]                                   # (batch, hidden)
    c0 = hidden[1][0]                                   # (batch, hidden)

    # Phase 1: input-side gate pre-activations for all steps in one big matmul.
    gates_x = matmul_bias(x_emb.reshape(seq_len * batch, embed),
                          w_ih.T, b_ih + b_hh)
    gates_x = gates_x.reshape(seq_len, batch, 4 * hidden_size)

    # Phase 2: sequential recurrence (time-blocked).
    try:
        rec = _lstm_recurrence(gates_x, w_hh.T, h0, c0,
                               time_block=time_block, single_buffer=True)
        rec = jax.block_until_ready(rec)
    except Exception:
        # Fallback if pl.Buffered(1) is not supported by this JAX/libtpu:
        # identical semantics with default double buffering.
        rec = _lstm_recurrence(gates_x, w_hh.T, h0, c0,
                               time_block=time_block, single_buffer=False)
    h_all, h_n, c_n = rec

    # Phase 3: vocab projection as one parallel matmul over all time steps.
    logits = matmul_bias(h_all.reshape(seq_len * batch, hidden_size),
                         w_lin.T, b_lin)

    return logits, (h_n[None, :, :], c_n[None, :, :])


def _reference_forward(text, hidden, params):
    """Pure-JAX reference matching PyTorch LSTM semantics (gate order i,f,g,o)."""
    emb, w_ih, w_hh, b_ih, b_hh, w_lin, b_lin = (
        params["embedding"], params["w_ih"], params["w_hh"],
        params["b_ih"], params["b_hh"], params["w_lin"], params["b_lin"])
    hs = w_hh.shape[1]
    x_emb = emb[text]
    h, c = hidden[0][0], hidden[1][0]

    def step(carry, x_t):
        h, c = carry
        gates = x_t @ w_ih.T + h @ w_hh.T + b_ih + b_hh
        i = jax.nn.sigmoid(gates[:, 0 * hs:1 * hs])
        f = jax.nn.sigmoid(gates[:, 1 * hs:2 * hs])
        g = jnp.tanh(gates[:, 2 * hs:3 * hs])
        o = jax.nn.sigmoid(gates[:, 3 * hs:4 * hs])
        c_new = f * c + i * g
        h_new = o * jnp.tanh(c_new)
        return (h_new, c_new), h_new

    (h_n, c_n), hs_all = jax.lax.scan(step, (h, c), x_emb)
    logits = hs_all.reshape(-1, hs) @ w_lin.T + b_lin
    return logits, (h_n[None], c_n[None])


if __name__ == "__main__":
    vocab_size, embed_size, hidden_size = 64, 16, 32
    seq_len, batch = 8, 4

    key = jax.random.PRNGKey(0)
    ks = jax.random.split(key, 8)
    bound = 1.0 / jnp.sqrt(hidden_size)
    params = {
        "embedding": jax.random.normal(ks[0], (vocab_size, embed_size), jnp.float32),
        "w_ih": jax.random.uniform(ks[1], (4 * hidden_size, embed_size), jnp.float32, -bound, bound),
        "w_hh": jax.random.uniform(ks[2], (4 * hidden_size, hidden_size), jnp.float32, -bound, bound),
        "b_ih": jax.random.uniform(ks[3], (4 * hidden_size,), jnp.float32, -bound, bound),
        "b_hh": jax.random.uniform(ks[4], (4 * hidden_size,), jnp.float32, -bound, bound),
        "w_lin": jax.random.uniform(ks[5], (vocab_size, hidden_size), jnp.float32, -bound, bound),
        "b_lin": jax.random.uniform(ks[6], (vocab_size,), jnp.float32, -bound, bound),
    }

    text = jax.random.randint(ks[7], (seq_len, batch), 0, vocab_size, jnp.int32)
    h0 = jnp.zeros((1, batch, hidden_size), jnp.float32)
    c0 = jnp.zeros((1, batch, hidden_size), jnp.float32)

    logits, (h_n, c_n) = language_model_forward(text, (h0, c0), params)
    jax.block_until_ready((logits, h_n, c_n))

    ref_logits, (ref_h, ref_c) = _reference_forward(text, (h0, c0), params)
    assert logits.shape == (seq_len * batch, vocab_size)
    assert h_n.shape == (1, batch, hidden_size) and c_n.shape == (1, batch, hidden_size)
    assert jnp.allclose(logits, ref_logits, atol=1e-4, rtol=1e-4)
    assert jnp.allclose(h_n, ref_h, atol=1e-4, rtol=1e-4)
    assert jnp.allclose(c_n, ref_c, atol=1e-4, rtol=1e-4)

    print("KERNEL_OK")
</pallas_src>

<mosaic_0001>
module attributes {stable_mosaic.version = 11 : i64} {
  func.func @_matmul_bias_kernel(%arg0: i32, %arg1: i32, %arg2: i32, %arg3: memref<32x16xf32, #tpu.memory_space<vmem>>, %arg4: memref<16x128xf32, #tpu.memory_space<vmem>>, %arg5: memref<1x128xf32, #tpu.memory_space<vmem>>, %arg6: memref<32x128xf32, #tpu.memory_space<vmem>>, %arg7: memref<32x128xf32, #tpu.memory_space<vmem>>) attributes {dimension_semantics = [#tpu.dimension_semantics<parallel>, #tpu.dimension_semantics<parallel>, #tpu.dimension_semantics<arbitrary>], iteration_bounds = array<i64: 1, 1, 1>, scalar_prefetch = 0 : i64, scratch_operands = 1 : i64, tpu.core_type = #tpu.core_type<tc>, window_params = [{transform_indices = @transform_0, window_bounds = array<i64: 32, 16>}, {transform_indices = @transform_1, window_bounds = array<i64: 16, 128>}, {transform_indices = @transform_2, window_bounds = array<i64: 1, 128>}, {transform_indices = @transform_3, window_bounds = array<i64: 32, 128>}]} {
    %c0_i32 = arith.constant 0 : i32
    %0 = arith.cmpi eq, %arg2, %c0_i32 : i32
    %1 = arith.extui %0 : i1 to i32
    %c0_i32_0 = arith.constant 0 : i32
    %2 = arith.cmpi ne, %1, %c0_i32_0 : i32
    scf.if %2 {
      %cst_10 = arith.constant 0.000000e+00 : f32
      %12 = vector.broadcast %cst_10 : f32 to vector<32x128xf32>
      %c0_11 = arith.constant 0 : index
      %c0_12 = arith.constant 0 : index
      %13 = vector.load %arg7[%c0_11, %c0_12] : memref<32x128xf32, #tpu.memory_space<vmem>>, vector<32x128xf32>
      tpu.vector_store %arg7[%c0_11, %c0_12], %12 {strides = array<i32>} : memref<32x128xf32, #tpu.memory_space<vmem>>, vector<32x128xf32>,
    } else {
    }
    %c0 = arith.constant 0 : index
    %c0_1 = arith.constant 0 : index
    %3 = vector.load %arg7[%c0, %c0_1] : memref<32x128xf32, #tpu.memory_space<vmem>>, vector<32x128xf32>
    %c0_2 = arith.constant 0 : index
    %c0_3 = arith.constant 0 : index
    %4 = vector.load %arg3[%c0_2, %c0_3] : memref<32x16xf32, #tpu.memory_space<vmem>>, vector<32x16xf32>
    %c0_4 = arith.constant 0 : index
    %c0_5 = arith.constant 0 : index
    %5 = vector.load %arg4[%c0_4, %c0_5] : memref<16x128xf32, #tpu.memory_space<vmem>>, vector<16x128xf32>
    %cst = arith.constant dense<0.000000e+00> : vector<32x128xf32>
    %6 = tpu.matmul %4, %5, %cst {dimension_numbers = #tpu.dot_dimension_numbers<[1], [0], [0], [1], [0, 0, 1, 1], [], []>} : vector<32x16xf32>, vector<16x128xf32>, vector<32x128xf32> -> vector<32x128xf32>
    %7 = arith.addf %3, %6 : vector<32x128xf32>
    %c0_6 = arith.constant 0 : index
    %c0_7 = arith.constant 0 : index
    %8 = vector.load %arg7[%c0_6, %c0_7] : memref<32x128xf32, #tpu.memory_space<vmem>>, vector<32x128xf32>
    tpu.vector_store %arg7[%c0_6, %c0_7], %7 {strides = array<i32>} : memref<32x128xf32, #tpu.memory_space<vmem>>, vector<32x128xf32>,
    %c0_i32_8 = arith.constant 0 : i32
    %9 = arith.cmpi eq, %arg2, %c0_i32_8 : i32
    %10 = arith.extui %9 : i1 to i32
    %c0_i32_9 = arith.constant 0 : i32
    %11 = arith.cmpi ne, %10, %c0_i32_9 : i32
    scf.if %11 {
      %c0_10 = arith.constant 0 : index
      %c0_11 = arith.constant 0 : index
      %12 = vector.load %arg7[%c0_10, %c0_11] : memref<32x128xf32, #tpu.memory_space<vmem>>, vector<32x128xf32>
      %c0_12 = arith.constant 0 : index
      %c0_13 = arith.constant 0 : index
      %13 = vector.load %arg5[%c0_12, %c0_13] : memref<1x128xf32, #tpu.memory_space<vmem>>, vector<1x128xf32>
      %14 = vector.broadcast %13 : vector<1x128xf32> to vector<32x128xf32>
      %15 = arith.addf %12, %14 : vector<32x128xf32>
      %c0_14 = arith.constant 0 : index
      %c0_15 = arith.constant 0 : index
      %16 = vector.load %arg6[%c0_14, %c0_15] : memref<32x128xf32, #tpu.memory_space<vmem>>, vector<32x128xf32>
      tpu.vector_store %arg6[%c0_14, %c0_15], %15 {strides = array<i32>} : memref<32x128xf32, #tpu.memory_space<vmem>>, vector<32x128xf32>,
    } else {
    }
    return
  }
  func.func @transform_0(%arg0: i32, %arg1: i32, %arg2: i32) -> (i32, i32) {
    %c0_i32 = arith.constant 0 : i32
    return %arg0, %arg2 : i32, i32
  }
  func.func @transform_1(%arg0: i32, %arg1: i32, %arg2: i32) -> (i32, i32) {
    %c0_i32 = arith.constant 0 : i32
    return %arg2, %arg1 : i32, i32
  }
  func.func @transform_2(%arg0: i32, %arg1: i32, %arg2: i32) -> (i32, i32) {
    %c0_i32 = arith.constant 0 : i32
    %c0_i32_0 = arith.constant 0 : i32
    return %c0_i32, %arg1 : i32, i32
  }
  func.func @transform_3(%arg0: i32, %arg1: i32, %arg2: i32) -> (i32, i32) {
    %c0_i32 = arith.constant 0 : i32
    return %arg0, %arg1 : i32, i32
  }
}

</mosaic_0001>

<llo_original>
// kernel: tpu_custom_call.1
$region0: #{tpu_custom_call.1}
  #allocation0 [shape = 'u32[]', space=smem, size = 0x4, offset = 0x4, fixed_abs, tag = 'smem constant byte address 0x4 - core index']
  #allocation1 [shape = 'u32[72,128]{1,0:T(1,128)}', space=vmem, size = 0x9000, scoped, tag = 'internal scratch']
  #allocation2 [shape = 'f32[32,128]{1,0:T(8,128)}', space=vmem, size = 0x4000, scoped, tag = 'scratch operand']
  %s0 = inlined_call_operand.vmem [shape: f32[32,16], index: 0, kind: input, shape index: {}]
  %s1 = inlined_call_operand.vmem [shape: f32[16,128], index: 1, kind: input, shape index: {}]
  %s2 = inlined_call_operand.vmem [shape: f32[1,128], index: 2, kind: input, shape index: {}]
  %s3 = inlined_call_operand.hbm [shape: f32[32,128], index: 3, kind: output, shape index: {}]
  %s4 = sld [smem:[#allocation0]]
  $region30: #{tpu_custom_call.1} parent=0
    _
  %s6 = ssub.s32 1, %s4
  %s7 = scalar_select 0, %s6, %s4
  $region1: #{tpu_custom_call.1} parent=0
    #allocation3 [shape = 'u8[16384]{0}', space=vmem, size = 0x4000, scoped, tag = 'output window, operand 0, single buffered']
    #allocation4 [shape = 's32[1]{0}', space=sflag, size = 0x4, scoped, tag = 'scoped memory for tpu_custom_call.1']
    %8 = vsyncpa [#allocation4], 0
    // Predicated region
    $region2: #{tpu_custom_call.1} parent=1 // pred_check
      _
    $region3: #{tpu_custom_call.1} parent=1 // pred_check_branch
      %10 = sbr.rel (0) target = $region5
    $region4: #{tpu_custom_call.1} parent=1 // pred_region
      _
    $region5: #{tpu_custom_call.1} parent=1 // pred_fallthru
      _
    // Predicated region
    $region6: #{tpu_custom_call.1} parent=1 // pred_check
      _
    $region7: #{tpu_custom_call.1} parent=1 // pred_check_branch
      %12 = sbr.rel (0) target = $region9
    $region8: #{tpu_custom_call.1} parent=1 // pred_region
      _
    $region9: #{tpu_custom_call.1} parent=1 // pred_fallthru
      _
    // Predicated region
    $region10: #{tpu_custom_call.1} parent=1 // pred_check
      _
    $region11: #{tpu_custom_call.1} parent=1 // pred_check_branch
      %14 = sbr.rel (0) target = $region13
    $region12: #{tpu_custom_call.1} parent=1 // pred_region
      _
    $region13: #{tpu_custom_call.1} parent=1 // pred_fallthru
      _
    %p15 = scmp.eq.s32.totalorder 0, 0
    // Predicated region
    $region14: #{tpu_custom_call.1} parent=1 // pred_check
      %p16 = pneg %p15
    $region15: #{tpu_custom_call.1} parent=1 // pred_check_branch
      %18 = sbr.rel (%p16) target = $region17
    $region16: #{tpu_custom_call.1} parent=1 // pred_region
      %19 = vst [vmem:[#allocation2] sm:$0xff] 0.0
      %20 = vst [vmem:[#allocation2 + $0x8] sm:$0xff] 0.0
      %21 = vst [vmem:[#allocation2 + $0x10] sm:$0xff] 0.0
      %22 = vst [vmem:[#allocation2 + $0x18] sm:$0xff] 0.0
    $region17: #{tpu_custom_call.1} parent=1 // pred_fallthru
      _
    %v23 = vld [vmem:[#allocation2] sm:$0xff]
    %v24 = vld [vmem:[#allocation2 + $0x8] sm:$0xff]
    %v25 = vld [vmem:[#allocation2 + $0x10] sm:$0xff]
    %v26 = vld [vmem:[#allocation2 + $0x18] sm:$0xff]
    %v27 = vld [vmem:[%s0] sm:$0xff]
    %v28 = vld [vmem:[%s0 + $0x8] sm:$0xff]
    %v29 = vld [vmem:[%s0 + $0x10] sm:$0xff]
    %v30 = vld [vmem:[%s0 + $0x18] sm:$0xff]
    %v31 = vld [vmem:[%s1] sm:$0xff]
    %v32 = vld [vmem:[%s1 + $0x8] sm:$0xff]
    %vm33 = vcmask 130048
    %v35 = vsel %vm33, %v27, 0
    %v38 = vsel %vm33, %v28, 0
    %v41 = vsel %vm33, %v29, 0
    %v44 = vsel %vm33, %v30, 0
    %46 = vmatpush.msra.mxu0 0.0
    %47 = vmatpush.msra.mxu0 0.0
    %48 = vmatpush.msra.mxu0 0.0
    %49 = vmatpush.msra.mxu0 0.0
    %50 = vmatpush.msra.mxu0 0.0
    %51 = vmatpush.msra.mxu0 0.0
    %52 = vmatpush.msra.mxu0 0.0
    %53 = vmatpush.msra.mxu0 0.0
    %54 = vmatpush.msra.mxu0 0.0
    %55 = vmatpush.msra.mxu0 0.0
    %56 = vmatpush.msra.mxu0 0.0
    %57 = vmatpush.msra.mxu0 0.0
    %58 = vmatpush.msra.mxu0 0.0
    %59 = vmatpush.msra.mxu0 0.0
    %60 = vmatpush.msra.mxu0 %v32
    %61 = vmatpush.msra.mxu0 %v31
    %62 = vmatmul.f32.gmra.mxu0 %v35
    %v63 = vpop.f32.mrf.mxu0
    %v64 = vadd.f32 0.0, %v63
    %65 = vmatmul.f32.gmra.mxu0 %v38
    %v66 = vpop.f32.mrf.mxu0
    %v67 = vadd.f32 0.0, %v66
    %68 = vmatmul.f32.gmra.mxu0 %v41
    %v69 = vpop.f32.mrf.mxu0
    %v70 = vadd.f32 0.0, %v69
    %71 = vmatmul.f32.gmra.mxu0 %v44
    %v72 = vpop.f32.mrf.mxu0
    %v73 = vadd.f32 0.0, %v72
    %74 = vdwg.mxu0
    %v75 = vadd.f32 %v23, %v64
    %v76 = vadd.f32 %v24, %v67
    %v77 = vadd.f32 %v25, %v70
    %v78 = vadd.f32 %v26, %v73
    %79 = vst [vmem:[#allocation2] sm:$0xff] %v75
    %80 = vst [vmem:[#allocation2 + $0x8] sm:$0xff] %v76
    %81 = vst [vmem:[#allocation2 + $0x10] sm:$0xff] %v77
    %82 = vst [vmem:[#allocation2 + $0x18] sm:$0xff] %v78
    // Predicated region
    $region18: #{tpu_custom_call.1} parent=1 // pred_check
      %p83 = pneg %p15
    $region19: #{tpu_custom_call.1} parent=1 // pred_check_branch
      %85 = sbr.rel (%p83) target = $region21
    $region20: #{tpu_custom_call.1} parent=1 // pred_region
      %v86 = vld [vmem:[#allocation2] sm:$0xff]
      %v87 = vld [vmem:[#allocation2 + $0x8] sm:$0xff]
      %v88 = vld [vmem:[#allocation2 + $0x10] sm:$0xff]
      %v89 = vld [vmem:[#allocation2 + $0x18] sm:$0xff]
      %v90 = vld [vmem:[%s2] sm:$0x1]
      %v92 = vperm.slane %v90, 0
      %v94 = vadd.f32 %v86, %v92
      %v95 = vadd.f32 %v87, %v92
      %v96 = vadd.f32 %v88, %v92
      %v97 = vadd.f32 %v89, %v92
      %98 = vst [vmem:[#allocation3] sm:$0xff] %v94
      %99 = vst [vmem:[#allocation3 + $0x8] sm:$0xff] %v95
      %100 = vst [vmem:[#allocation3 + $0x10] sm:$0xff] %v96
      %101 = vst [vmem:[#allocation3 + $0x18] sm:$0xff] %v97
    $region21: #{tpu_custom_call.1} parent=1 // pred_fallthru
      _
    // Predicated region
    $region22: #{tpu_custom_call.1} parent=1 // pred_check
      _
    $region23: #{tpu_custom_call.1} parent=1 // pred_check_branch
      %103 = sbr.rel (0) target = $region25
    $region24: #{tpu_custom_call.1} parent=1 // pred_region
      %105 = vsyncadd [#allocation4], 0
      %s106 = sshll.u32 [#allocation3], 4
      %s107 = int_to_ptr.vmem [resolvable:$true] %s106
      %s108 = sshll.u32 %s3, 4
      %s109 = int_to_ptr.hbm [resolvable:$true] %s108
      %114 = dma.vmem_to_hbm [thread:$0]  %s107, 512, %s109, [#allocation4], 128, 128, 8
    $region25: #{tpu_custom_call.1} parent=1 // pred_fallthru
      _
    // Predicated region
    $region26: #{tpu_custom_call.1} parent=1 // pred_check
      _
    $region27: #{tpu_custom_call.1} parent=1 // pred_check_branch
      %116 = sbr.rel (0) target = $region29
    $region28: #{tpu_custom_call.1} parent=1 // pred_region
      %118 = dma.done [#allocation4], 512
    $region29: #{tpu_custom_call.1} parent=1 // pred_fallthru
      _
    %119 = vsyncpa [#allocation4], 1

</llo_original>
